<compile_context>
chip_gen: v7x
topology: tpu7x:2x2x1
jax: 0.10.0
libtpu: 0.0.40
codegen_flags: <defaults>
</compile_context>

<pallas_src>
from functools import partial

import numpy as np
import jax
import jax.numpy as jnp
from jax.experimental import pallas as pl
from jax.experimental.pallas import tpu as pltpu

LANES = 128
_EPS = 1e-6
# Inert pad value for gt: eq(1)=False, lt(1)=False (relies on the STRICT `< 1`
# comparison), not NaN -> contributes nothing to any accumulator.
_PAD_GT = 2.0


def _round_up(x, m):
    return ((x + m - 1) // m) * m


def _focal_kernel(pred_ref, gt_ref, out_ref,
                  loss_acc, npos_acc, nan_acc,
                  *, tm, m_rows, ragged):
    c = pl.program_id(1)
    nc = pl.num_programs(1)

    @pl.when(c == 0)
    def _():
        loss_acc[...] = jnp.zeros_like(loss_acc)
        npos_acc[...] = jnp.zeros_like(npos_acc)
        nan_acc[...] = jnp.zeros_like(nan_acc)

    def accumulate(masked):
        x = pred_ref[...].astype(jnp.float32)    # (tm, 128)
        gt = gt_ref[...].astype(jnp.float32)

        pos_m = gt == 1.0
        neg_m = gt < 1.0
        nan_m = jnp.isnan(gt)
        if masked:
            # The last chunk may overrun the real row count; out-of-bounds
            # rows hold unspecified VMEM data, but every contribution below is
            # gated by these in_bounds-derived selects (NaN-safe).
            row_ids = jax.lax.broadcasted_iota(jnp.int32, gt.shape, 0)
            in_bounds = (c * tm + row_ids) < m_rows
            pos_m = jnp.logical_and(in_bounds, pos_m)
            neg_m = jnp.logical_and(in_bounds, neg_m)
            nan_m = jnp.logical_and(in_bounds, nan_m)

        p = jax.nn.sigmoid(x)
        one_m_p = 1.0 - p
        # (1 - gt)^4 with explicit squares -> VPU only, no EUP pow / NaN leak.
        t = 1.0 - gt
        t2 = t * t
        neg_w = t2 * t2

        # jnp.where selects keep NaN gt / stale OOB rows out of the sums.
        pos_term = jnp.where(pos_m, jnp.log(p + _EPS) * (one_m_p * one_m_p), 0.0)
        neg_term = jnp.where(neg_m, jnp.log(one_m_p + _EPS) * (p * p) * neg_w, 0.0)

        # vreg-aligned (8, 128) partial sums: sublane-split on an 8-boundary
        # is a no-op relayout, so the accumulation is pure VPU vreg adds.
        loss_acc[...] += (pos_term + neg_term).reshape(tm // 8, 8, LANES).sum(axis=0)
        npos_acc[...] += jnp.where(pos_m, 1.0, 0.0).reshape(tm // 8, 8, LANES).sum(axis=0)
        nan_acc[...] += jnp.where(nan_m, 1.0, 0.0).reshape(tm // 8, 8, LANES).sum(axis=0)

    if ragged:
        @pl.when(c < nc - 1)
        def _():
            accumulate(masked=False)

        @pl.when(c == nc - 1)
        def _():
            accumulate(masked=True)
    else:
        accumulate(masked=False)

    @pl.when(c == nc - 1)
    def _():
        # Single cross-sublane/lane (XLU) reduce per sample.
        # Merged-accumulator invariant: pos_sum == 0 whenever num_pos == 0, so
        # -loss_sum reproduces the reference's `-neg_loss` branch exactly.
        loss_sum = jnp.sum(loss_acc[...])
        num_pos = jnp.sum(npos_acc[...])
        nan_cnt = jnp.sum(nan_acc[...])
        loss = jnp.where(num_pos == 0.0,
                         -loss_sum,
                         -loss_sum / jnp.maximum(num_pos, 1.0))
        valid = jnp.where(nan_cnt == 0.0, 1.0, 0.0)
        row = jax.lax.broadcasted_iota(jnp.int32, (2, LANES), 0)
        out_ref[...] = jnp.where(row == 0, loss, valid)


@partial(jax.jit, static_argnames=("tile_rows",))
def focal_loss_device(pred, gt, tile_rows=4096):
    """Fully on-device: returns (loss (B,), valid (B,)).

    loss[i] is the focal loss of sample i; valid[i] == 1.0 iff gt[i] contains
    no NaN (matches the PyTorch skip condition).
    """
    B = pred.shape[0]
    n = int(np.prod(pred.shape[1:]))
    n_pad = _round_up(n, LANES)
    M = n_pad // LANES

    pred_f = jnp.reshape(pred, (B, n))   # native dtype, no upcast
    gt_f = jnp.reshape(gt, (B, n))
    if n_pad != n:
        # TODO(synk): this jnp.pad rewrites both tensors through HBM; it only
        # triggers when C*H*W is not a 128-multiple (pad values are inert for
        # the loss). Avoiding it would require giving up the free
        # (B, M, 128) lane-major reshape.
        pred_f = jnp.pad(pred_f, ((0, 0), (0, n_pad - n)))
        gt_f = jnp.pad(gt_f, ((0, 0), (0, n_pad - n)), constant_values=_PAD_GT)

    pred_t = pred_f.reshape(B, M, LANES)
    gt_t = gt_f.reshape(B, M, LANES)

    # Chunk size: sublane-aligned, capped so 2 inputs x 2 buffers (plus the
    # compiler's elementwise temporaries) stay within scoped VMEM on
    # v5e / v6e / v7x.  tm=4096 -> 2 MiB per block, 8 MiB of input buffers.
    tm = min(_round_up(tile_rows, 8), _round_up(M, 8))
    num_chunks = pl.cdiv(M, tm)
    ragged = (M % tm) != 0

    kernel = partial(_focal_kernel, tm=tm, m_rows=M, ragged=ragged)
    out = pl.pallas_call(
        kernel,
        out_shape=jax.ShapeDtypeStruct((B, 2, LANES), jnp.float32),
        grid=(B, num_chunks),
        in_specs=[
            pl.BlockSpec((None, tm, LANES), lambda b, c: (b, c, 0)),
            pl.BlockSpec((None, tm, LANES), lambda b, c: (b, c, 0)),
        ],
        out_specs=pl.BlockSpec((None, 2, LANES), lambda b, c: (b, 0, 0)),
        scratch_shapes=[pltpu.VMEM((8, LANES), jnp.float32)] * 3,
        compiler_params=pltpu.CompilerParams(
            dimension_semantics=("parallel", "arbitrary"),
            vmem_limit_bytes=48 * 1024 * 1024),
    )(pred_t, gt_t)

    loss = out[:, 0, 0]
    valid = out[:, 1, 0]
    return loss, valid


def focal_loss(pred, gt, tile_rows=4096):
    """Matches FocalLoss.forward: stacked per-valid-sample losses, or None."""
    loss, valid = focal_loss_device(pred, gt, tile_rows=tile_rows)
    # TODO(synk): ragged NaN-sample filtering / returning None is inherently
    # data-dependent in shape, so it stays on host (single (B,) device_get).
    loss = np.asarray(jax.device_get(loss))
    valid = np.asarray(jax.device_get(valid)) > 0.5
    if not valid.any():
        return None
    return jnp.asarray(loss[valid].astype(np.float32))


def _reference(pred, gt):
    """Pure-numpy reference replicating the PyTorch forward."""
    pred = np.asarray(pred, np.float32)
    gt = np.asarray(gt, np.float32)
    out = []
    for i in range(pred.shape[0]):
        g = gt[i]
        if np.isnan(g).any():
            continue
        p = 1.0 / (1.0 + np.exp(-pred[i]))
        pos = (g == 1.0).astype(np.float32)
        neg = (g < 1.0).astype(np.float32)
        nw = np.power(1.0 - g, 4)
        pl_ = np.log(p + _EPS) * np.square(1.0 - p) * pos
        nl_ = np.log(1.0 - p + _EPS) * np.square(p) * nw * neg
        num_pos = pos.sum()
        pls, nls = pl_.sum(), nl_.sum()
        out.append(-nls if num_pos == 0 else -(pls + nls) / num_pos)
    return None if not out else np.stack(out).astype(np.float32)


if __name__ == "__main__":
    key = jax.random.PRNGKey(0)
    k1, k2, k3 = jax.random.split(key, 3)

    # Test A: n = C*H*W = 1280 -> M = 10 lane-rows (ragged w.r.t. any tm%8==0).
    B, C, H, W = 3, 4, 16, 20
    pred = jax.random.normal(k1, (B, C, H, W), dtype=jnp.float32)
    # gt: heatmap-like targets in [0, 1) with a few exact 1.0 peaks.
    gt = jax.random.uniform(k2, (B, C, H, W), dtype=jnp.float32, maxval=0.99)
    peak_mask = jax.random.uniform(k3, (B, C, H, W)) > 0.98
    gt = jnp.where(peak_mask, 1.0, gt)
    # Make the last sample invalid (contains NaN) to exercise the skip path.
    gt = gt.at[B - 1, 0, 0, 0].set(jnp.nan)

    ref = _reference(pred, gt)
    assert ref is not None

    # Multi-chunk path with a masked ragged last chunk (tm=8, M=10 -> 2 chunks).
    out = jax.block_until_ready(focal_loss(pred, gt, tile_rows=8))
    assert out is not None and out.shape == ref.shape
    np.testing.assert_allclose(np.asarray(out), ref, rtol=1e-4, atol=1e-5)

    # Production tiling path: single (masked) chunk per sample here.
    out2 = jax.block_until_ready(focal_loss(pred, gt))
    np.testing.assert_allclose(np.asarray(out2), ref, rtol=1e-4, atol=1e-5)

    # Test B: n = 2048 -> M = 16, tm = 8 -> two full chunks, NO mask emitted
    # (exercises the hoisted-mask hot path + cross-chunk accumulation).
    k4, k5, k6 = jax.random.split(jax.random.PRNGKey(1), 3)
    B2, C2, H2, W2 = 2, 4, 16, 32
    pred2 = jax.random.normal(k4, (B2, C2, H2, W2), dtype=jnp.float32)
    gt2 = jax.random.uniform(k5, (B2, C2, H2, W2), dtype=jnp.float32, maxval=0.99)
    gt2 = jnp.where(jax.random.uniform(k6, (B2, C2, H2, W2)) > 0.98, 1.0, gt2)
    ref2 = _reference(pred2, gt2)
    out3 = jax.block_until_ready(focal_loss(pred2, gt2, tile_rows=8))
    assert out3 is not None and out3.shape == ref2.shape
    np.testing.assert_allclose(np.asarray(out3), ref2, rtol=1e-4, atol=1e-5)

    print("KERNEL_OK")
</pallas_src>

<mosaic_0001>
module attributes {stable_mosaic.version = 11 : i64} {
  func.func @_focal_kernel(%arg0: i32, %arg1: i32, %arg2: memref<1x8x128xf32, #tpu.memory_space<vmem>>, %arg3: memref<1x8x128xf32, #tpu.memory_space<vmem>>, %arg4: memref<1x2x128xf32, #tpu.memory_space<vmem>>, %arg5: memref<8x128xf32, #tpu.memory_space<vmem>>, %arg6: memref<8x128xf32, #tpu.memory_space<vmem>>, %arg7: memref<8x128xf32, #tpu.memory_space<vmem>>) attributes {dimension_semantics = [#tpu.dimension_semantics<parallel>, #tpu.dimension_semantics<arbitrary>], iteration_bounds = array<i64: 3, 2>, scalar_prefetch = 0 : i64, scratch_operands = 3 : i64, tpu.core_type = #tpu.core_type<tc>, window_params = [{transform_indices = @transform_0, window_bounds = array<i64: 1, 8, 128>}, {transform_indices = @transform_1, window_bounds = array<i64: 1, 8, 128>}, {transform_indices = @transform_2, window_bounds = array<i64: 1, 2, 128>}]} {
    %c0_i32 = arith.constant 0 : i32
    %0 = arith.cmpi eq, %arg1, %c0_i32 : i32
    %1 = arith.extui %0 : i1 to i32
    %c0_i32_0 = arith.constant 0 : i32
    %2 = arith.cmpi ne, %1, %c0_i32_0 : i32
    scf.if %2 {
      %cst = arith.constant 0.000000e+00 : f32
      %12 = vector.broadcast %cst : f32 to vector<8x128xf32>
      %c0 = arith.constant 0 : index
      %c0_6 = arith.constant 0 : index
      %13 = vector.load %arg5[%c0, %c0_6] : memref<8x128xf32, #tpu.memory_space<vmem>>, vector<8x128xf32>
      tpu.vector_store %arg5[%c0, %c0_6], %12 {strides = array<i32>} : memref<8x128xf32, #tpu.memory_space<vmem>>, vector<8x128xf32>,
      %cst_7 = arith.constant 0.000000e+00 : f32
      %14 = vector.broadcast %cst_7 : f32 to vector<8x128xf32>
      %c0_8 = arith.constant 0 : index
      %c0_9 = arith.constant 0 : index
      %15 = vector.load %arg6[%c0_8, %c0_9] : memref<8x128xf32, #tpu.memory_space<vmem>>, vector<8x128xf32>
      tpu.vector_store %arg6[%c0_8, %c0_9], %14 {strides = array<i32>} : memref<8x128xf32, #tpu.memory_space<vmem>>, vector<8x128xf32>,
      %cst_10 = arith.constant 0.000000e+00 : f32
      %16 = vector.broadcast %cst_10 : f32 to vector<8x128xf32>
      %c0_11 = arith.constant 0 : index
      %c0_12 = arith.constant 0 : index
      %17 = vector.load %arg7[%c0_11, %c0_12] : memref<8x128xf32, #tpu.memory_space<vmem>>, vector<8x128xf32>
      tpu.vector_store %arg7[%c0_11, %c0_12], %16 {strides = array<i32>} : memref<8x128xf32, #tpu.memory_space<vmem>>, vector<8x128xf32>,
    } else {
    }
    %c1_i32 = arith.constant 1 : i32
    %3 = arith.cmpi slt, %arg1, %c1_i32 : i32
    %4 = arith.extui %3 : i1 to i32
    %c0_i32_1 = arith.constant 0 : i32
    %5 = arith.cmpi ne, %4, %c0_i32_1 : i32
    scf.if %5 {
      %c0 = arith.constant 0 : index
      %c0_6 = arith.constant 0 : index
      %c0_7 = arith.constant 0 : index
      %12 = vector.load %arg2[%c0, %c0_6, %c0_7] : memref<1x8x128xf32, #tpu.memory_space<vmem>>, vector<1x8x128xf32>
      %13 = vector.shape_cast %12 : vector<1x8x128xf32> to vector<8x128xf32>
      %c0_8 = arith.constant 0 : index
      %c0_9 = arith.constant 0 : index
      %c0_10 = arith.constant 0 : index
      %14 = vector.load %arg3[%c0_8, %c0_9, %c0_10] : memref<1x8x128xf32, #tpu.memory_space<vmem>>, vector<1x8x128xf32>
      %15 = vector.shape_cast %14 : vector<1x8x128xf32> to vector<8x128xf32>
      %cst = arith.constant 1.000000e+00 : f32
      %16 = vector.broadcast %cst : f32 to vector<8x128xf32>
      %17 = arith.cmpf oeq, %15, %16 : vector<8x128xf32>
      %cst_11 = arith.constant 1.000000e+00 : f32
      %18 = vector.broadcast %cst_11 : f32 to vector<8x128xf32>
      %19 = arith.cmpf olt, %15, %18 : vector<8x128xf32>
      %20 = arith.cmpf one, %15, %15 : vector<8x128xf32>
      %21 = arith.negf %13 : vector<8x128xf32>
      %22 = math.exp %21 : vector<8x128xf32>
      %cst_12 = arith.constant 1.000000e+00 : f32
      %23 = vector.broadcast %cst_12 : f32 to vector<8x128xf32>
      %24 = arith.addf %23, %22 : vector<8x128xf32>
      %25 = arith.divf %23, %24 : vector<8x128xf32>
      %cst_13 = arith.constant 1.000000e+00 : f32
      %26 = vector.broadcast %cst_13 : f32 to vector<8x128xf32>
      %27 = arith.subf %26, %25 : vector<8x128xf32>
      %cst_14 = arith.constant 1.000000e+00 : f32
      %28 = vector.broadcast %cst_14 : f32 to vector<8x128xf32>
      %29 = arith.subf %28, %15 : vector<8x128xf32>
      %30 = arith.mulf %29, %29 : vector<8x128xf32>
      %31 = arith.mulf %30, %30 : vector<8x128xf32>
      %cst_15 = arith.constant 9.99999997E-7 : f32
      %32 = vector.broadcast %cst_15 : f32 to vector<8x128xf32>
      %33 = arith.addf %25, %32 : vector<8x128xf32>
      %34 = math.log %33 : vector<8x128xf32>
      %35 = arith.mulf %27, %27 : vector<8x128xf32>
      %36 = arith.mulf %34, %35 : vector<8x128xf32>
      %cst_16 = arith.constant 0.000000e+00 : f32
      %37 = vector.broadcast %cst_16 : f32 to vector<8x128xf32>
      %38 = arith.select %17, %36, %37 : vector<8x128xi1>, vector<8x128xf32>
      %cst_17 = arith.constant 9.99999997E-7 : f32
      %39 = vector.broadcast %cst_17 : f32 to vector<8x128xf32>
      %40 = arith.addf %27, %39 : vector<8x128xf32>
      %41 = math.log %40 : vector<8x128xf32>
      %42 = arith.mulf %25, %25 : vector<8x128xf32>
      %43 = arith.mulf %41, %42 : vector<8x128xf32>
      %44 = arith.mulf %43, %31 : vector<8x128xf32>
      %cst_18 = arith.constant 0.000000e+00 : f32
      %45 = vector.broadcast %cst_18 : f32 to vector<8x128xf32>
      %46 = arith.select %19, %44, %45 : vector<8x128xi1>, vector<8x128xf32>
      %c0_19 = arith.constant 0 : index
      %c0_20 = arith.constant 0 : index
      %47 = vector.load %arg5[%c0_19, %c0_20] : memref<8x128xf32, #tpu.memory_space<vmem>>, vector<8x128xf32>
      %48 = arith.addf %38, %46 : vector<8x128xf32>
      %49 = vector.shape_cast %48 : vector<8x128xf32> to vector<1x8x128xf32>
      %cst_21 = arith.constant dense<0.000000e+00> : vector<8x128xf32>
      %50 = vector.multi_reduction <add>, %49, %cst_21 [0] : vector<1x8x128xf32> to vector<8x128xf32>
      %51 = arith.addf %47, %50 : vector<8x128xf32>
      %c0_22 = arith.constant 0 : index
      %c0_23 = arith.constant 0 : index
      %52 = vector.load %arg5[%c0_22, %c0_23] : memref<8x128xf32, #tpu.memory_space<vmem>>, vector<8x128xf32>
      tpu.vector_store %arg5[%c0_22, %c0_23], %51 {strides = array<i32>} : memref<8x128xf32, #tpu.memory_space<vmem>>, vector<8x128xf32>,
      %c0_24 = arith.constant 0 : index
      %c0_25 = arith.constant 0 : index
      %53 = vector.load %arg6[%c0_24, %c0_25] : memref<8x128xf32, #tpu.memory_space<vmem>>, vector<8x128xf32>
      %cst_26 = arith.constant 1.000000e+00 : f32
      %cst_27 = arith.constant 0.000000e+00 : f32
      %54 = vector.broadcast %cst_26 : f32 to vector<8x128xf32>
      %55 = vector.broadcast %cst_27 : f32 to vector<8x128xf32>
      %56 = arith.select %17, %54, %55 : vector<8x128xi1>, vector<8x128xf32>
      %57 = vector.shape_cast %56 : vector<8x128xf32> to vector<1x8x128xf32>
      %cst_28 = arith.constant dense<0.000000e+00> : vector<8x128xf32>
      %58 = vector.multi_reduction <add>, %57, %cst_28 [0] : vector<1x8x128xf32> to vector<8x128xf32>
      %59 = arith.addf %53, %58 : vector<8x128xf32>
      %c0_29 = arith.constant 0 : index
      %c0_30 = arith.constant 0 : index
      %60 = vector.load %arg6[%c0_29, %c0_30] : memref<8x128xf32, #tpu.memory_space<vmem>>, vector<8x128xf32>
      tpu.vector_store %arg6[%c0_29, %c0_30], %59 {strides = array<i32>} : memref<8x128xf32, #tpu.memory_space<vmem>>, vector<8x128xf32>,
      %c0_31 = arith.constant 0 : index
      %c0_32 = arith.constant 0 : index
      %61 = vector.load %arg7[%c0_31, %c0_32] : memref<8x128xf32, #tpu.memory_space<vmem>>, vector<8x128xf32>
      %cst_33 = arith.constant 1.000000e+00 : f32
      %cst_34 = arith.constant 0.000000e+00 : f32
      %62 = vector.broadcast %cst_33 : f32 to vector<8x128xf32>
      %63 = vector.broadcast %cst_34 : f32 to vector<8x128xf32>
      %64 = arith.select %20, %62, %63 : vector<8x128xi1>, vector<8x128xf32>
      %65 = vector.shape_cast %64 : vector<8x128xf32> to vector<1x8x128xf32>
      %cst_35 = arith.constant dense<0.000000e+00> : vector<8x128xf32>
      %66 = vector.multi_reduction <add>, %65, %cst_35 [0] : vector<1x8x128xf32> to vector<8x128xf32>
      %67 = arith.addf %61, %66 : vector<8x128xf32>
      %c0_36 = arith.constant 0 : index
      %c0_37 = arith.constant 0 : index
      %68 = vector.load %arg7[%c0_36, %c0_37] : memref<8x128xf32, #tpu.memory_space<vmem>>, vector<8x128xf32>
      tpu.vector_store %arg7[%c0_36, %c0_37], %67 {strides = array<i32>} : memref<8x128xf32, #tpu.memory_space<vmem>>, vector<8x128xf32>,
    } else {
    }
    %c1_i32_2 = arith.constant 1 : i32
    %6 = arith.cmpi eq, %arg1, %c1_i32_2 : i32
    %7 = arith.extui %6 : i1 to i32
    %c0_i32_3 = arith.constant 0 : i32
    %8 = arith.cmpi ne, %7, %c0_i32_3 : i32
    scf.if %8 {
      %c0 = arith.constant 0 : index
      %c0_6 = arith.constant 0 : index
      %c0_7 = arith.constant 0 : index
      %12 = vector.load %arg2[%c0, %c0_6, %c0_7] : memref<1x8x128xf32, #tpu.memory_space<vmem>>, vector<1x8x128xf32>
      %13 = vector.shape_cast %12 : vector<1x8x128xf32> to vector<8x128xf32>
      %c0_8 = arith.constant 0 : index
      %c0_9 = arith.constant 0 : index
      %c0_10 = arith.constant 0 : index
      %14 = vector.load %arg3[%c0_8, %c0_9, %c0_10] : memref<1x8x128xf32, #tpu.memory_space<vmem>>, vector<1x8x128xf32>
      %15 = vector.shape_cast %14 : vector<1x8x128xf32> to vector<8x128xf32>
      %cst = arith.constant 1.000000e+00 : f32
      %16 = vector.broadcast %cst : f32 to vector<8x128xf32>
      %17 = arith.cmpf oeq, %15, %16 : vector<8x128xf32>
      %cst_11 = arith.constant 1.000000e+00 : f32
      %18 = vector.broadcast %cst_11 : f32 to vector<8x128xf32>
      %19 = arith.cmpf olt, %15, %18 : vector<8x128xf32>
      %20 = arith.cmpf one, %15, %15 : vector<8x128xf32>
      %21 = tpu.iota {dimensions = array<i32: 0>} : vector<8x128xi32>
      %c8_i32 = arith.constant 8 : i32
      %22 = arith.muli %arg1, %c8_i32 : i32
      %23 = vector.broadcast %22 : i32 to vector<8x128xi32>
      %24 = arith.addi %23, %21 : vector<8x128xi32>
      %c10_i32 = arith.constant 10 : i32
      %25 = vector.broadcast %c10_i32 : i32 to vector<8x128xi32>
      %26 = arith.cmpi slt, %24, %25 : vector<8x128xi32>
      %27 = arith.andi %26, %17 : vector<8x128xi1>
      %28 = arith.andi %26, %19 : vector<8x128xi1>
      %29 = arith.andi %26, %20 : vector<8x128xi1>
      %30 = arith.negf %13 : vector<8x128xf32>
      %31 = math.exp %30 : vector<8x128xf32>
      %cst_12 = arith.constant 1.000000e+00 : f32
      %32 = vector.broadcast %cst_12 : f32 to vector<8x128xf32>
      %33 = arith.addf %32, %31 : vector<8x128xf32>
      %34 = arith.divf %32, %33 : vector<8x128xf32>
      %cst_13 = arith.constant 1.000000e+00 : f32
      %35 = vector.broadcast %cst_13 : f32 to vector<8x128xf32>
      %36 = arith.subf %35, %34 : vector<8x128xf32>
      %cst_14 = arith.constant 1.000000e+00 : f32
      %37 = vector.broadcast %cst_14 : f32 to vector<8x128xf32>
      %38 = arith.subf %37, %15 : vector<8x128xf32>
      %39 = arith.mulf %38, %38 : vector<8x128xf32>
      %40 = arith.mulf %39, %39 : vector<8x128xf32>
      %cst_15 = arith.constant 9.99999997E-7 : f32
      %41 = vector.broadcast %cst_15 : f32 to vector<8x128xf32>
      %42 = arith.addf %34, %41 : vector<8x128xf32>
      %43 = math.log %42 : vector<8x128xf32>
      %44 = arith.mulf %36, %36 : vector<8x128xf32>
      %45 = arith.mulf %43, %44 : vector<8x128xf32>
      %cst_16 = arith.constant 0.000000e+00 : f32
      %46 = vector.broadcast %cst_16 : f32 to vector<8x128xf32>
      %47 = arith.select %27, %45, %46 : vector<8x128xi1>, vector<8x128xf32>
      %cst_17 = arith.constant 9.99999997E-7 : f32
      %48 = vector.broadcast %cst_17 : f32 to vector<8x128xf32>
      %49 = arith.addf %36, %48 : vector<8x128xf32>
      %50 = math.log %49 : vector<8x128xf32>
      %51 = arith.mulf %34, %34 : vector<8x128xf32>
      %52 = arith.mulf %50, %51 : vector<8x128xf32>
      %53 = arith.mulf %52, %40 : vector<8x128xf32>
      %cst_18 = arith.constant 0.000000e+00 : f32
      %54 = vector.broadcast %cst_18 : f32 to vector<8x128xf32>
      %55 = arith.select %28, %53, %54 : vector<8x128xi1>, vector<8x128xf32>
      %c0_19 = arith.constant 0 : index
      %c0_20 = arith.constant 0 : index
      %56 = vector.load %arg5[%c0_19, %c0_20] : memref<8x128xf32, #tpu.memory_space<vmem>>, vector<8x128xf32>
      %57 = arith.addf %47, %55 : vector<8x128xf32>
      %58 = vector.shape_cast %57 : vector<8x128xf32> to vector<1x8x128xf32>
      %cst_21 = arith.constant dense<0.000000e+00> : vector<8x128xf32>
      %59 = vector.multi_reduction <add>, %58, %cst_21 [0] : vector<1x8x128xf32> to vector<8x128xf32>
      %60 = arith.addf %56, %59 : vector<8x128xf32>
      %c0_22 = arith.constant 0 : index
      %c0_23 = arith.constant 0 : index
      %61 = vector.load %arg5[%c0_22, %c0_23] : memref<8x128xf32, #tpu.memory_space<vmem>>, vector<8x128xf32>
      tpu.vector_store %arg5[%c0_22, %c0_23], %60 {strides = array<i32>} : memref<8x128xf32, #tpu.memory_space<vmem>>, vector<8x128xf32>,
      %c0_24 = arith.constant 0 : index
      %c0_25 = arith.constant 0 : index
      %62 = vector.load %arg6[%c0_24, %c0_25] : memref<8x128xf32, #tpu.memory_space<vmem>>, vector<8x128xf32>
      %cst_26 = arith.constant 1.000000e+00 : f32
      %cst_27 = arith.constant 0.000000e+00 : f32
      %63 = vector.broadcast %cst_26 : f32 to vector<8x128xf32>
      %64 = vector.broadcast %cst_27 : f32 to vector<8x128xf32>
      %65 = arith.select %27, %63, %64 : vector<8x128xi1>, vector<8x128xf32>
      %66 = vector.shape_cast %65 : vector<8x128xf32> to vector<1x8x128xf32>
      %cst_28 = arith.constant dense<0.000000e+00> : vector<8x128xf32>
      %67 = vector.multi_reduction <add>, %66, %cst_28 [0] : vector<1x8x128xf32> to vector<8x128xf32>
      %68 = arith.addf %62, %67 : vector<8x128xf32>
      %c0_29 = arith.constant 0 : index
      %c0_30 = arith.constant 0 : index
      %69 = vector.load %arg6[%c0_29, %c0_30] : memref<8x128xf32, #tpu.memory_space<vmem>>, vector<8x128xf32>
      tpu.vector_store %arg6[%c0_29, %c0_30], %68 {strides = array<i32>} : memref<8x128xf32, #tpu.memory_space<vmem>>, vector<8x128xf32>,
      %c0_31 = arith.constant 0 : index
      %c0_32 = arith.constant 0 : index
      %70 = vector.load %arg7[%c0_31, %c0_32] : memref<8x128xf32, #tpu.memory_space<vmem>>, vector<8x128xf32>
      %cst_33 = arith.constant 1.000000e+00 : f32
      %cst_34 = arith.constant 0.000000e+00 : f32
      %71 = vector.broadcast %cst_33 : f32 to vector<8x128xf32>
      %72 = vector.broadcast %cst_34 : f32 to vector<8x128xf32>
      %73 = arith.select %29, %71, %72 : vector<8x128xi1>, vector<8x128xf32>
      %74 = vector.shape_cast %73 : vector<8x128xf32> to vector<1x8x128xf32>
      %cst_35 = arith.constant dense<0.000000e+00> : vector<8x128xf32>
      %75 = vector.multi_reduction <add>, %74, %cst_35 [0] : vector<1x8x128xf32> to vector<8x128xf32>
      %76 = arith.addf %70, %75 : vector<8x128xf32>
      %c0_36 = arith.constant 0 : index
      %c0_37 = arith.constant 0 : index
      %77 = vector.load %arg7[%c0_36, %c0_37] : memref<8x128xf32, #tpu.memory_space<vmem>>, vector<8x128xf32>
      tpu.vector_store %arg7[%c0_36, %c0_37], %76 {strides = array<i32>} : memref<8x128xf32, #tpu.memory_space<vmem>>, vector<8x128xf32>,
    } else {
    }
    %c1_i32_4 = arith.constant 1 : i32
    %9 = arith.cmpi eq, %arg1, %c1_i32_4 : i32
    %10 = arith.extui %9 : i1 to i32
    %c0_i32_5 = arith.constant 0 : i32
    %11 = arith.cmpi ne, %10, %c0_i32_5 : i32
    scf.if %11 {
      %c0 = arith.constant 0 : index
      %c0_6 = arith.constant 0 : index
      %12 = vector.load %arg5[%c0, %c0_6] : memref<8x128xf32, #tpu.memory_space<vmem>>, vector<8x128xf32>
      %13 = vector.shape_cast %12 : vector<8x128xf32> to vector<1x8x128xf32>
      %cst = arith.constant dense<0.000000e+00> : vector<1xf32>
      %14 = vector.multi_reduction <add>, %13, %cst [1, 2] : vector<1x8x128xf32> to vector<1xf32>
      %15 = vector.shape_cast %14 : vector<1xf32> to vector<1x1x1xf32>
      %16 = vector.extract %15[0, 0, 0] : f32 from vector<1x1x1xf32>
      %c0_7 = arith.constant 0 : index
      %c0_8 = arith.constant 0 : index
      %17 = vector.load %arg6[%c0_7, %c0_8] : memref<8x128xf32, #tpu.memory_space<vmem>>, vector<8x128xf32>
      %18 = vector.shape_cast %17 : vector<8x128xf32> to vector<1x8x128xf32>
      %cst_9 = arith.constant dense<0.000000e+00> : vector<1xf32>
      %19 = vector.multi_reduction <add>, %18, %cst_9 [1, 2] : vector<1x8x128xf32> to vector<1xf32>
      %20 = vector.shape_cast %19 : vector<1xf32> to vector<1x1x1xf32>
      %21 = vector.extract %20[0, 0, 0] : f32 from vector<1x1x1xf32>
      %c0_10 = arith.constant 0 : index
      %c0_11 = arith.constant 0 : index
      %22 = vector.load %arg7[%c0_10, %c0_11] : memref<8x128xf32, #tpu.memory_space<vmem>>, vector<8x128xf32>
      %23 = vector.shape_cast %22 : vector<8x128xf32> to vector<1x8x128xf32>
      %cst_12 = arith.constant dense<0.000000e+00> : vector<1xf32>
      %24 = vector.multi_reduction <add>, %23, %cst_12 [1, 2] : vector<1x8x128xf32> to vector<1xf32>
      %25 = vector.shape_cast %24 : vector<1xf32> to vector<1x1x1xf32>
      %26 = vector.extract %25[0, 0, 0] : f32 from vector<1x1x1xf32>
      %cst_13 = arith.constant 0.000000e+00 : f32
      %27 = arith.cmpf oeq, %21, %cst_13 : f32
      %cst_14 = arith.constant 0.000000e+00 : f32
      %28 = arith.subf %cst_14, %16 : f32
      %cst_15 = arith.constant 0.000000e+00 : f32
      %29 = arith.subf %cst_15, %16 : f32
      %cst_16 = arith.constant 1.000000e+00 : f32
      %30 = arith.maximumf %21, %cst_16 : f32
      %31 = arith.divf %29, %30 : f32
      %32 = arith.select %27, %28, %31 : f32
      %cst_17 = arith.constant 0.000000e+00 : f32
      %33 = arith.cmpf oeq, %26, %cst_17 : f32
      %cst_18 = arith.constant 1.000000e+00 : f32
      %cst_19 = arith.constant 0.000000e+00 : f32
      %34 = arith.select %33, %cst_18, %cst_19 : f32
      %35 = tpu.iota {dimensions = array<i32: 0>} : vector<2x128xi32>
      %c0_i32_20 = arith.constant 0 : i32
      %36 = vector.broadcast %c0_i32_20 : i32 to vector<2x128xi32>
      %37 = arith.cmpi eq, %35, %36 : vector<2x128xi32>
      %38 = vector.broadcast %32 : f32 to vector<2x128xf32>
      %39 = vector.broadcast %34 : f32 to vector<2x128xf32>
      %40 = arith.select %37, %38, %39 : vector<2x128xi1>, vector<2x128xf32>
      %c0_21 = arith.constant 0 : index
      %c0_22 = arith.constant 0 : index
      %c0_23 = arith.constant 0 : index
      %41 = vector.load %arg4[%c0_21, %c0_22, %c0_23] : memref<1x2x128xf32, #tpu.memory_space<vmem>>, vector<1x2x128xf32>
      %42 = vector.shape_cast %41 : vector<1x2x128xf32> to vector<2x128xf32>
      %43 = vector.shape_cast %40 : vector<2x128xf32> to vector<1x2x128xf32>
      tpu.vector_store %arg4[%c0_21, %c0_22, %c0_23], %43 {strides = array<i32>} : memref<1x2x128xf32, #tpu.memory_space<vmem>>, vector<1x2x128xf32>,
    } else {
    }
    return
  }
  func.func @transform_0(%arg0: i32, %arg1: i32) -> (i32, i32, i32) {
    %c0_i32 = arith.constant 0 : i32
    %c0_i32_0 = arith.constant 0 : i32
    return %arg0, %arg1, %c0_i32 : i32, i32, i32
  }
  func.func @transform_1(%arg0: i32, %arg1: i32) -> (i32, i32, i32) {
    %c0_i32 = arith.constant 0 : i32
    %c0_i32_0 = arith.constant 0 : i32
    return %arg0, %arg1, %c0_i32 : i32, i32, i32
  }
  func.func @transform_2(%arg0: i32, %arg1: i32) -> (i32, i32, i32) {
    %c0_i32 = arith.constant 0 : i32
    %c0_i32_0 = arith.constant 0 : i32
    %c0_i32_1 = arith.constant 0 : i32
    return %arg0, %c0_i32, %c0_i32_0 : i32, i32, i32
  }
}

</mosaic_0001>

<llo_original>
// kernel: focal_loss_device.1
$region0: #{focal_loss_device.1}
  #allocation0 [shape = 'u32[]', space=smem, size = 0x4, offset = 0x4, fixed_abs, tag = 'smem constant byte address 0x4 - core index']
  #allocation1 [shape = 'u32[144,128]{1,0:T(1,128)}', space=vmem, size = 0x12000, scoped, tag = 'internal scratch']
  #allocation2 [shape = 'f32[8,128]{1,0:T(8,128)}', space=vmem, size = 0x1000, scoped, tag = 'scratch operand']
  #allocation3 [shape = 'f32[8,128]{1,0:T(8,128)}', space=vmem, size = 0x1000, scoped, tag = 'scratch operand']
  #allocation4 [shape = 'f32[8,128]{1,0:T(8,128)}', space=vmem, size = 0x1000, scoped, tag = 'scratch operand']
  %s0 = inlined_call_operand.vmem [shape: f32[3,10,128], index: 0, kind: input, shape index: {}]
  %s1 = inlined_call_operand.vmem [shape: f32[3,10,128], index: 1, kind: input, shape index: {}]
  %s2 = inlined_call_operand.vmem [shape: f32[3,2,128], index: 2, kind: output, shape index: {}]
  %s3 = sld [smem:[#allocation0]]
  $region53: #{focal_loss_device.1} parent=0
    _
  %s5 = ssub.s32 1, %s3
  %s6 = scalar_select 0, %s5, %s3
  loop: start=0, step=1, limit=8
  $region2: #{focal_loss_device.1} parent=0 // loop_pre_header
    _
  $region3: #{focal_loss_device.1} parent=0 // loop_header
    %s8 = sphi 0, %s12
    %p9 = scmp.ge.s32.totalorder %s8, 8
    %s15 = sphi 0, %s27
    %s16 = sphi 0, %s23
    %s17 = sphi 0, %s15
    %s18 = sphi 0, %s16
    %s19 = sphi 0, %s17
    %s20 = sphi 0, %s18
    %s32 = sphi 0, %s34
    %s35 = sphi 0, %s32
    %s36 = sphi 0, %s35
    %s52 = sphi 0, %s36
    %s60 = sphi 0, %s62
    %s63 = sphi 0, %s60
    %s64 = sphi 0, %s63
    %s80 = sphi 0, %s64
    %s86 = sphi 0, %s88
    %s89 = sphi 0, %s86
    %s90 = sphi 0, %s89
    %s106 = sphi 0, %s90
  $region4: #{focal_loss_device.1} parent=0 // loop_header_branch
    %11 = sbr.rel (%p9) target = $region8
  $region5: #{focal_loss_device.1} parent=0 // loop_body
    %s13 = ssub.s32 %s8, 1
    %s14 = ssub.s32 %s8, 2
    %s21 = sadd.s32 1, %s16
    %p22 = scmp.ge.s32.totalorder %s21, 2
    %s23 = scalar_select %p22, 0, %s21
    %s24 = sadd.s32 1, %s15
    %s25 = scalar_select %p22, %s24, %s15
    %p26 = scmp.ge.s32.totalorder %s25, 3
    %s27 = scalar_select %p26, 0, %s25
    %s28 = ssub.s32 %s15, %s27
    %s29 = ssub.s32 %s16, %s23
    %s30 = sor.u32 %s28, %s29
    %p31 = scmp.eq.s32.totalorder %s30, 0
    %s33 = sadd.s32 %s32, 1
    %s34 = scalar_select %p31, %s32, %s33
    %p37 = pneg %p31
    %p38 = scmp.eq.s32.totalorder %s8, 5
    %p39 = por %p37, %p38
    %p40 = scmp.ne.s32.totalorder %s32, %s35
    %p41 = scmp.eq.s32.totalorder %s8, 0
    %p42 = por %p40, %p41
    %p43 = scmp.ne.s32.totalorder %s32, %s35
    %p44 = scmp.eq.s32.totalorder %s13, 5
    %p45 = por %p43, %p44
    %p46 = scmp.ne.s32.totalorder %s35, %s36
    %p47 = scmp.eq.s32.totalorder %s13, 0
    %p48 = por %p46, %p47
    %p49 = scmp.ne.s32.totalorder %s35, %s36
    %p50 = scmp.eq.s32.totalorder %s14, 5
    %p51 = por %p49, %p50
    %p53 = scmp.ne.s32.totalorder %s36, %s52
    %p54 = scmp.eq.s32.totalorder %s14, 0
    %p55 = por %p53, %p54
    %s56 = ssub.s32 %s15, %s27
    %s57 = ssub.s32 %s16, %s23
    %s58 = sor.u32 %s56, %s57
    %p59 = scmp.eq.s32.totalorder %s58, 0
    %s61 = sadd.s32 %s60, 1
    %s62 = scalar_select %p59, %s60, %s61
    %p65 = pneg %p59
    %p66 = scmp.eq.s32.totalorder %s8, 5
    %p67 = por %p65, %p66
    %p68 = scmp.ne.s32.totalorder %s60, %s63
    %p69 = scmp.eq.s32.totalorder %s8, 0
    %p70 = por %p68, %p69
    %p71 = scmp.ne.s32.totalorder %s60, %s63
    %p72 = scmp.eq.s32.totalorder %s13, 5
    %p73 = por %p71, %p72
    %p74 = scmp.ne.s32.totalorder %s63, %s64
    %p75 = scmp.eq.s32.totalorder %s13, 0
    %p76 = por %p74, %p75
    %p77 = scmp.ne.s32.totalorder %s63, %s64
    %p78 = scmp.eq.s32.totalorder %s14, 5
    %p79 = por %p77, %p78
    %p81 = scmp.ne.s32.totalorder %s64, %s80
    %p82 = scmp.eq.s32.totalorder %s14, 0
    %p83 = por %p81, %p82
    %s84 = ssub.s32 %s15, %s27
    %p85 = scmp.eq.s32.totalorder %s84, 0
    %s87 = sadd.s32 %s86, 1
    %s88 = scalar_select %p85, %s86, %s87
    %p91 = pneg %p85
    %p92 = scmp.eq.s32.totalorder %s8, 5
    %p93 = por %p91, %p92
    %p94 = scmp.ne.s32.totalorder %s86, %s89
    %p95 = scmp.eq.s32.totalorder %s8, 0
    %p96 = por %p94, %p95
    %p97 = scmp.ne.s32.totalorder %s86, %s89
    %p98 = scmp.eq.s32.totalorder %s13, 5
    %p99 = por %p97, %p98
    %p100 = scmp.ne.s32.totalorder %s89, %s90
    %p101 = scmp.eq.s32.totalorder %s13, 0
    %p102 = por %p100, %p101
    %p103 = scmp.ne.s32.totalorder %s89, %s90
    %p104 = scmp.eq.s32.totalorder %s14, 5
    %p105 = por %p103, %p104
    %p107 = scmp.ne.s32.totalorder %s90, %s106
    %p108 = scmp.eq.s32.totalorder %s14, 0
    %p109 = por %p107, %p108
    %p110 = scmp.le.s32.totalorder 1, %s8
    %p111 = scmp.lt.s32.totalorder %s8, 7
    %p112 = pnand %p110, %p111
    %p113 = pneg %p112
    // Predicated region
    $region9: #{focal_loss_device.1} parent=5 // pred_check
      _
    $region10: #{focal_loss_device.1} parent=5 // pred_check_branch
      %115 = sbr.rel (%p112) target = $region12
    $region11: #{focal_loss_device.1} parent=5 // pred_region
      %s116 = ssub.s32 %s8, 1
    $region12: #{focal_loss_device.1} parent=5 // pred_fallthru
      _
    %p117 = scmp.lt.s32.totalorder %s8, 6
    // Predicated region
    $region13: #{focal_loss_device.1} parent=5 // pred_check
      %p118 = pneg %p117
    $region14: #{focal_loss_device.1} parent=5 // pred_check_branch
      %120 = sbr.rel (%p118) target = $region16
    $region15: #{focal_loss_device.1} parent=5 // pred_region
      // Predicated region
      $region17: #{focal_loss_device.1} parent=15 // pred_check
        %p121 = pneg %p42
      $region18: #{focal_loss_device.1} parent=15 // pred_check_branch
        %123 = sbr.rel (%p121) target = $region20
      $region19: #{focal_loss_device.1} parent=15 // pred_region
        %p124 = scmp.lt.s32.totalorder %s15, 2
        %s125 = scalar_select %p124, %s15, 2
        %p126 = scmp.lt.s32.totalorder %s16, 1
        %s127 = scalar_select %p126, %s16, 1
        %s128 = smul.addr %s125, 2
        %s129 = sadd.s32 %s127, %s128
        %s130 = smul.addr %s129, 8
        %s131 = scalar_lea.vmem %s0, %s130
      $region20: #{focal_loss_device.1} parent=15 // pred_fallthru
        _
      // Predicated region
      $region21: #{focal_loss_device.1} parent=15 // pred_check
        %p132 = pneg %p70
      $region22: #{focal_loss_device.1} parent=15 // pred_check_branch
        %134 = sbr.rel (%p132) target = $region24
      $region23: #{focal_loss_device.1} parent=15 // pred_region
        %p135 = scmp.lt.s32.totalorder %s15, 2
        %s136 = scalar_select %p135, %s15, 2
        %p137 = scmp.lt.s32.totalorder %s16, 1
        %s138 = scalar_select %p137, %s16, 1
        %s139 = smul.addr %s136, 2
        %s140 = sadd.s32 %s138, %s139
        %s141 = smul.addr %s140, 8
        %s142 = scalar_lea.vmem %s1, %s141
      $region24: #{focal_loss_device.1} parent=15 // pred_fallthru
        _
    $region16: #{focal_loss_device.1} parent=5 // pred_fallthru
      _
    %p143 = scmp.le.s32.totalorder 1, %s8
    %p144 = scmp.lt.s32.totalorder %s8, 7
    %p145 = pnand %p143, %p144
    %p146 = pneg %p145
    // Predicated region
    $region25: #{focal_loss_device.1} parent=5 // pred_check
      _
    $region26: #{focal_loss_device.1} parent=5 // pred_check_branch
      %148 = sbr.rel (%p145) target = $region28
    $region27: #{focal_loss_device.1} parent=5 // pred_region
      %s149 = ssub.s32 %s8, 1
      %p150 = scmp.lt.s32.totalorder %s17, 2
      %s151 = scalar_select %p150, %s17, 2
      %p152 = scmp.lt.s32.totalorder %s18, 1
      %s153 = scalar_select %p152, %s18, 1
      %s154 = smul.addr %s151, 2
      %s155 = sadd.s32 %s153, %s154
      %s156 = smul.addr %s155, 8
      %s157 = scalar_lea.vmem %s0, %s156
      %p158 = pneg %p48
      %p159 = pneg %p45
      %p160 = scmp.lt.s32.totalorder %s17, 2
      %s161 = scalar_select %p160, %s17, 2
      %p162 = scmp.lt.s32.totalorder %s18, 1
      %s163 = scalar_select %p162, %s18, 1
      %s164 = smul.addr %s161, 2
      %s165 = sadd.s32 %s163, %s164
      %s166 = smul.addr %s165, 8
      %s167 = scalar_lea.vmem %s1, %s166
      %p168 = pneg %p76
      %p169 = pneg %p73
      %p170 = pneg %p102
      %p171 = pneg %p99
      %p172 = scmp.lt.s32.totalorder %s17, 2
      %s173 = scalar_select %p172, %s17, 2
      %s174 = smul.addr %s173, 2
      %s175 = scalar_lea.vmem %s2, %s174
      %p176 = scmp.lt.s32.totalorder %s17, 2
      %s177 = scalar_select %p176, %s17, 2
      %p178 = scmp.lt.s32.totalorder %s18, 1
      %s179 = scalar_select %p178, %s18, 1
      %s180 = smul.addr %s177, 2
      %s181 = sadd.s32 %s179, %s180
      %s182 = smul.addr %s181, 8
      %s183 = scalar_lea.vmem %s0, %s182
      %p184 = scmp.lt.s32.totalorder %s17, 2
      %s185 = scalar_select %p184, %s17, 2
      %p186 = scmp.lt.s32.totalorder %s18, 1
      %s187 = scalar_select %p186, %s18, 1
      %s188 = smul.addr %s185, 2
      %s189 = sadd.s32 %s187, %s188
      %s190 = smul.addr %s189, 8
      %s191 = scalar_lea.vmem %s1, %s190
      %p192 = scmp.lt.s32.totalorder %s17, 2
      %s193 = scalar_select %p192, %s17, 2
      %s194 = smul.addr %s193, 2
      %s195 = scalar_lea.vmem %s2, %s194
      %p196 = scmp.eq.s32.totalorder %s18, 0
      // Predicated region
      $region29: #{focal_loss_device.1} parent=27 // pred_check
        %p197 = pneg %p196
      $region30: #{focal_loss_device.1} parent=27 // pred_check_branch
        %199 = sbr.rel (%p197) target = $region32
      $region31: #{focal_loss_device.1} parent=27 // pred_region
        %200 = vst [vmem:[#allocation2] sm:$0xff] 0.0
        %201 = vst [vmem:[#allocation3] sm:$0xff] 0.0
        %202 = vst [vmem:[#allocation4] sm:$0xff] 0.0
      $region32: #{focal_loss_device.1} parent=27 // pred_fallthru
        _
      %p203 = scmp.lt.s32.totalorder %s18, 1
      // Predicated region
      $region33: #{focal_loss_device.1} parent=27 // pred_check
        %p204 = pneg %p203
      $region34: #{focal_loss_device.1} parent=27 // pred_check_branch
        %206 = sbr.rel (%p204) target = $region36
      $region35: #{focal_loss_device.1} parent=27 // pred_region
        %v207 = vld [vmem:[%s183] sm:$0xff]
        %v208 = vld [vmem:[%s191] sm:$0xff]
        %vm209 = vcmp.eq.f32.partialorder %v208, 1.0
        %vm210 = vcmp.lt.f32.partialorder %v208, 1.0
        %vm211 = vcmp.ne.f32.partialorder %v208, %v208
        %v212 = vxor.u32 %v207, 2147483648
        %v213 = vmul.f32 %v212, 1.442695
        %v214 = vpow.pop %v213
        %v215 = vadd.f32 %v214, 1.0
        %v216 = vrcp.pop %v215
        %v217 = vmul.f32 1.0, %v216
        %v218 = vsub.f32 1.0, %v217
        %v219 = vsub.f32 1.0, %v208
        %v220 = vmul.f32 %v219, %v219
        %v221 = vmul.f32 %v220, %v220
        %v222 = vadd.f32 %v217, 1e-06
        %v223 = vlog2.pop %v222
        %v224 = vmul.f32 %v223, 0.6931472
        %v225 = vmul.f32 %v218, %v218
        %v226 = vmul.f32 %v224, %v225
        %v227 = vsel %vm209, %v226, 0.0
        %v228 = vadd.f32 %v218, 1e-06
        %v229 = vlog2.pop %v228
        %v230 = vmul.f32 %v229, 0.6931472
        %v231 = vmul.f32 %v217, %v217
        %v232 = vmul.f32 %v230, %v231
        %v233 = vmul.f32 %v232, %v221
        %v234 = vsel %vm210, %v233, 0.0
        %v235 = vld [vmem:[#allocation2] sm:$0xff]
        %v236 = vadd.f32 %v227, %v234
        %v237 = vadd.f32 %v236, 0.0
        %v238 = vadd.f32 %v235, %v237
        %239 = vst [vmem:[#allocation2] sm:$0xff] %v238
        %v240 = vld [vmem:[#allocation3] sm:$0xff]
        %v241 = vsel %vm209, 1.0, 0.0
        %v242 = vadd.f32 %v241, 0.0
        %v243 = vadd.f32 %v240, %v242
        %244 = vst [vmem:[#allocation3] sm:$0xff] %v243
        %v245 = vld [vmem:[#allocation4] sm:$0xff]
        %v246 = vsel %vm211, 1.0, 0.0
        %v247 = vadd.f32 %v246, 0.0
        %v248 = vadd.f32 %v245, %v247
        %249 = vst [vmem:[#allocation4] sm:$0xff] %v248
      $region36: #{focal_loss_device.1} parent=27 // pred_fallthru
        _
      %p250 = scmp.eq.s32.totalorder %s18, 1
      // Predicated region
      $region37: #{focal_loss_device.1} parent=27 // pred_check
        %p251 = pneg %p250
      $region38: #{focal_loss_device.1} parent=27 // pred_check_branch
        %253 = sbr.rel (%p251) target = $region40
      $region39: #{focal_loss_device.1} parent=27 // pred_region
        %v254 = vld [vmem:[%s183] sm:$0xff]
        %v255 = vld [vmem:[%s191] sm:$0xff]
        %vm256 = vcmp.eq.f32.partialorder %v255, 1.0
        %vm257 = vcmp.lt.f32.partialorder %v255, 1.0
        %vm258 = vcmp.ne.f32.partialorder %v255, %v255
        %v259 = vlaneseq
        %v260 = vshrl.u32 %v259, 7
        %s261 = smul.u32 %s18, 8
        %v262 = vstv %s261
        %v263 = vadd.s32 %v262, %v260
        %vm264 = vcmp.lt.s32.totalorder %v263, 10
        %vm265 = vmand %vm264, %vm256
        %vm266 = vmand %vm264, %vm257
        %vm267 = vmand %vm264, %vm258
        %v268 = vxor.u32 %v254, 2147483648
        %v269 = vmul.f32 %v268, 1.442695
        %v270 = vpow.pop %v269
        %v271 = vadd.f32 %v270, 1.0
        %v272 = vrcp.pop %v271
        %v273 = vmul.f32 1.0, %v272
        %v274 = vsub.f32 1.0, %v273
        %v275 = vsub.f32 1.0, %v255
        %v276 = vmul.f32 %v275, %v275
        %v277 = vmul.f32 %v276, %v276
        %v278 = vadd.f32 %v273, 1e-06
        %v279 = vlog2.pop %v278
        %v280 = vmul.f32 %v279, 0.6931472
        %v281 = vmul.f32 %v274, %v274
        %v282 = vmul.f32 %v280, %v281
        %v283 = vsel %vm265, %v282, 0.0
        %v284 = vadd.f32 %v274, 1e-06
        %v285 = vlog2.pop %v284
        %v286 = vmul.f32 %v285, 0.6931472
        %v287 = vmul.f32 %v273, %v273
        %v288 = vmul.f32 %v286, %v287
        %v289 = vmul.f32 %v288, %v277
        %v290 = vsel %vm266, %v289, 0.0
        %v291 = vld [vmem:[#allocation2] sm:$0xff]
        %v292 = vadd.f32 %v283, %v290
        %v293 = vadd.f32 %v292, 0.0
        %v294 = vadd.f32 %v291, %v293
        %295 = vst [vmem:[#allocation2] sm:$0xff] %v294
        %v296 = vld [vmem:[#allocation3] sm:$0xff]
        %v297 = vsel %vm265, 1.0, 0.0
        %v298 = vadd.f32 %v297, 0.0
        %v299 = vadd.f32 %v296, %v298
        %300 = vst [vmem:[#allocation3] sm:$0xff] %v299
        %v301 = vld [vmem:[#allocation4] sm:$0xff]
        %v302 = vsel %vm267, 1.0, 0.0
        %v303 = vadd.f32 %v302, 0.0
        %v304 = vadd.f32 %v301, %v303
        %305 = vst [vmem:[#allocation4] sm:$0xff] %v304
        %v306 = vld [vmem:[#allocation2] sm:$0xff]
        %307 = vadd.xlane.f32.xlu0 %v306
        %v308 = vpop.xlane.xlu0 %307
        %v309 = vrot.slane %v308, 4
        %v310 = vadd.f32 %v308, %v309
        %v311 = vrot.slane %v310, 2
        %v312 = vadd.f32 %v310, %v311
        %v313 = vrot.slane %v312, 1
        %v314 = vadd.f32 %v312, %v313
        %s315 = vtos %v314
        %v316 = vld [vmem:[#allocation3] sm:$0xff]
        %317 = vadd.xlane.f32.xlu0 %v316
        %v318 = vpop.xlane.xlu0 %317
        %v319 = vrot.slane %v318, 4
        %v320 = vadd.f32 %v318, %v319
        %v321 = vrot.slane %v320, 2
        %v322 = vadd.f32 %v320, %v321
        %v323 = vrot.slane %v322, 1
        %v324 = vadd.f32 %v322, %v323
        %s325 = vtos %v324
        %v326 = vld [vmem:[#allocation4] sm:$0xff]
        %327 = vadd.xlane.f32.xlu0 %v326
        %v328 = vpop.xlane.xlu0 %327
        %v329 = vrot.slane %v328, 4
        %v330 = vadd.f32 %v328, %v329
        %v331 = vrot.slane %v330, 2
        %v332 = vadd.f32 %v330, %v331
        %v333 = vrot.slane %v332, 1
        %v334 = vadd.f32 %v332, %v333
        %s335 = vtos %v334
        %p336 = scmp.eq.f32.partialorder %s325, 0.0
        %s337 = ssub.f32 0.0, %s315
        %s338 = smax.f32 %s325, 1.0
        %v339 = vstv %s338
        %v340 = vrcp.pop %v339
        %s341 = vtos %v340
        %s342 = smul.f32 %s337, %s341
        %s343 = scalar_select %p336, %s337, %s342
        %p344 = scmp.eq.f32.partialorder %s335, 0.0
        %s345 = scalar_select %p344, 1.0, 0.0
        %vm346 = vcmp.eq.s32.totalorder %v260, 0
        %v347 = vstv %s343
        %v348 = vstv %s345
        %v349 = vsel %vm346, %v347, %v348
        %350 = vst [vmem:[%s195] sm:$0x3] %v349
      $region40: #{focal_loss_device.1} parent=27 // pred_fallthru
        _
      %p351 = scmp.lt.s32.totalorder %s17, 2
      %s352 = scalar_select %p351, %s17, 2
      %s353 = smul.addr %s352, 2
      %s354 = scalar_lea.vmem %s2, %s353
      // Predicated region
      $region41: #{focal_loss_device.1} parent=27 // pred_check
        %p355 = pneg %p99
      $region42: #{focal_loss_device.1} parent=27 // pred_check_branch
        %357 = sbr.rel (%p355) target = $region44
      $region43: #{focal_loss_device.1} parent=27 // pred_region
        _
      $region44: #{focal_loss_device.1} parent=27 // pred_fallthru
        _
    $region28: #{focal_loss_device.1} parent=5 // pred_fallthru
      _
    %p358 = scmp.le.s32.totalorder 2, %s8
    // Predicated region
    $region45: #{focal_loss_device.1} parent=5 // pred_check
      %p359 = pneg %p358
    $region46: #{focal_loss_device.1} parent=5 // pred_check_branch
      %361 = sbr.rel (%p359) target = $region48
    $region47: #{focal_loss_device.1} parent=5 // pred_region
      %s362 = ssub.s32 %s8, 2
      // Predicated region
      $region49: #{focal_loss_device.1} parent=47 // pred_check
        %p363 = pneg %p105
      $region50: #{focal_loss_device.1} parent=47 // pred_check_branch
        %365 = sbr.rel (%p363) target = $region52
      $region51: #{focal_loss_device.1} parent=47 // pred_region
        %p366 = scmp.lt.s32.totalorder %s19, 2
        %s367 = scalar_select %p366, %s19, 2
        %s368 = smul.addr %s367, 2
        %s369 = scalar_lea.vmem %s2, %s368
      $region52: #{focal_loss_device.1} parent=47 // pred_fallthru
        _
    $region48: #{focal_loss_device.1} parent=5 // pred_fallthru
      _
  $region6: #{focal_loss_device.1} parent=0 // loop_footer
    %s12 = sadd.s32 1, %s8
  $region7: #{focal_loss_device.1} parent=0 // loop_footer_branch
    %7 = sbr.rel target = $region3
  $region8: #{focal_loss_device.1} parent=0 // loop_exit
    _

</llo_original>
